<compile_context>
chip_gen: v7x
topology: tpu7x:2x2x1
jax: 0.10.0
libtpu: 0.0.40
codegen_flags: <defaults>
</compile_context>

<pallas_src>
import jax
import jax.numpy as jnp
from jax.experimental import pallas as pl
from jax.experimental.pallas import tpu as pltpu


def _round_up(x, m):
    return (x + m - 1) // m * m


def _vmem_capacity_bytes():
    """Physical VMEM of the current TPU generation (fallback: 64 MiB, v7x-safe)."""
    try:
        info = pltpu.get_tpu_info()
        for name in ("vmem_capacity_bytes", "vmem_bytes", "vmem_size_bytes"):
            cap = getattr(info, name, None)
            if cap:
                return int(cap)
    except Exception:
        pass
    return 64 * 1024 * 1024


def _pick_batch_tile(B_eff, S, E, D, W, itemsize, vmem_budget_bytes):
    """Batch-tile rows (multiple of 8, <= B_eff) whose resident working set fits
    the per-generation VMEM budget."""
    per_row = (
        2 * S * E * itemsize          # double-buffered enc input tile
        + 2 * S * E * 4               # f32 context weighted-sum temporaries
        + 3 * S * W * 4               # We-projection / tanh / score-product f32 temps
        + 6 * S * 4                   # bias tile + score/exp/alpha columns (f32)
        + 2 * D * itemsize            # dec tile
        + 2 * E * itemsize + E * 4    # out tile + f32 context row
    )
    fixed = 2 * (E * W + D * W + 2 * W) * itemsize   # weight tiles (constant index map)
    tb = (vmem_budget_bytes - fixed) // max(per_row, 1)
    cap = (B_eff // 8) * 8                           # block dim must not exceed array dim
    tb = max(8, min(tb, cap) // 8 * 8)
    if B_eff >= 16:                                   # keep >=2 grid steps for dual-TC (v7x)
        tb = min(tb, _round_up(pl.cdiv(B_eff, 2), 8))
    return int(tb)


def _additive_attention_kernel(enc_ref, dec_ref, bias_ref,
                               we_w_ref, we_b_ref, wd_w_ref, v_ref,
                               out_ref):
    S, TB, E = enc_ref.shape            # full seq, batch tile (mult of 8), full enc dim
    W = we_w_ref.shape[1]               # weightsSize (unpadded)

    enc = enc_ref[...]                  # (S, TB, E) native dtype -> MXU directly
    we_w = we_w_ref[...]                # (E, W)
    wd_w = wd_w_ref[...]                # (D, W)
    we_b = we_b_ref[...].astype(jnp.float32)   # (1, W)
    v = v_ref[...].astype(jnp.float32)         # (1, W)

    # We(enc): leading dims (S, TB) merge for free (TB multiple of 8) -> one MXU
    # matmul with f32 accumulation, result back in the (S, TB, W) layout.
    wE = jnp.dot(enc.reshape(S * TB, E), we_w,
                 preferred_element_type=jnp.float32).reshape(S, TB, W)

    # Wd(dec) with the We bias folded in: a single (TB, W) add instead of an
    # extra (S, TB, W) broadcast add.
    wD = jnp.dot(dec_ref[...], wd_w, preferred_element_type=jnp.float32) + we_b

    # scores[s, b] = <v, tanh(We x_sb + Wd h_b + b)>   (EUP tanh + lane reduce)
    t = jnp.tanh(wE + wD[None, :, :])                              # (S, TB, W) f32
    scores = jnp.sum(t * v[None, :, :], axis=-1, keepdims=True)    # (S, TB, 1)
    scores = scores + bias_ref[...]          # additive padding mask (-1e30 on pads)

    # Softmax over the sequence (leading) axis: plain vreg-wise max/adds, no XLU.
    m = jnp.max(scores, axis=0, keepdims=True)                     # (1, TB, 1)
    e = jnp.exp(scores - m)                                        # (S, TB, 1)
    denom = jnp.sum(e, axis=0, keepdims=True)                      # (1, TB, 1)
    alpha = e / denom                                              # (S, TB, 1) f32

    # context[b, :] = sum_s alpha[s, b] * enc[s, b, :] — pure VPU weighted sum
    # over the leading axis (no per-row MXU restaging, no big broadcast temp).
    ctx = jnp.sum(alpha * enc.astype(jnp.float32), axis=0)         # (TB, E) f32
    out_ref[...] = ctx.astype(out_ref.dtype)


def additive_attention(encoderContexts, decoderHiddenVector, params,
                       paddingMask=None, *, batch_tile=None):
    """encoderContexts (S,B,E), decoderHiddenVector (1,B,D) -> (1,B,E)."""
    S, B, E = encoderContexts.shape
    D = decoderHiddenVector.shape[-1]
    W = params["We_w"].shape[0]          # torch Linear stores weight as (out, in)

    enc = encoderContexts                # native (S, B, E) layout — no HBM round trip
    dec = decoderHiddenVector.reshape(B, D)

    # Padding mask (1 == pad) -> additive score bias in the kernel's (S, B, 1)
    # layout.  Finite -1e30: exp underflows to exactly 0 (matches the reference
    # whenever a row has >=1 unmasked position; fully-masked rows get uniform
    # weights instead of NaN).
    if paddingMask is None:
        bias = jnp.zeros((S, B, 1), jnp.float32)
    else:
        bias = jnp.where(jnp.transpose(paddingMask).astype(bool)[:, :, None],
                         jnp.float32(-1e30), jnp.float32(0.0))

    # Only tiny batches need padding (batch tile must be a multiple of 8);
    # realistic batches (B >= 8) are consumed in place, tail blocks are partial.
    B_eff = B
    if B < 8:
        pad = 8 - B
        enc = jnp.pad(enc, ((0, 0), (0, pad), (0, 0)))
        dec = jnp.pad(dec, ((0, pad), (0, 0)))
        bias = jnp.pad(bias, ((0, 0), (0, pad), (0, 0)))
        B_eff = 8

    # Weights pre-transposed to (in, out).  No lane padding: full-extent blocks
    # are legal, and padding E/W would only inflate DMA + VPU/EUP work on zeros.
    we_w = jnp.transpose(params["We_w"])          # (E, W)
    we_b = params["We_b"].reshape(1, W)
    wd_w = jnp.transpose(params["Wd_w"])          # (D, W)
    v_w = params["v_w"].reshape(1, W)

    # Generation-aware VMEM budgeting (128 MiB v5e/v6e -> ~32 MiB tile budget,
    # 64 MiB limit; 64 MiB v7x -> ~16 MiB budget, 32 MiB limit).
    itemsize = jnp.dtype(enc.dtype).itemsize
    vmem_cap = _vmem_capacity_bytes()
    budget = max(vmem_cap // 4, 8 * 1024 * 1024)
    vmem_limit = max(vmem_cap // 2, 32 * 1024 * 1024)

    if batch_tile is None:
        TB = _pick_batch_tile(B_eff, S, E, D, W, itemsize, budget)
    else:
        TB = max(8, min(int(batch_tile), (B_eff // 8) * 8) // 8 * 8)

    grid = (pl.cdiv(B_eff, TB),)

    out = pl.pallas_call(
        _additive_attention_kernel,
        out_shape=jax.ShapeDtypeStruct((B_eff, E), enc.dtype),
        grid=grid,
        in_specs=[
            # enc: full-S, batch-tiled, full-E blocks straight from the native layout.
            pl.BlockSpec((S, TB, E), lambda i: (0, i, 0)),
            pl.BlockSpec((TB, D), lambda i: (i, 0)),
            pl.BlockSpec((S, TB, 1), lambda i: (0, i, 0)),
            # Weights / bias: constant index_map -> fetched once, not re-DMA'd per tile.
            pl.BlockSpec((E, W), lambda i: (0, 0)),
            pl.BlockSpec((1, W), lambda i: (0, 0)),
            pl.BlockSpec((D, W), lambda i: (0, 0)),
            pl.BlockSpec((1, W), lambda i: (0, 0)),
        ],
        out_specs=pl.BlockSpec((TB, E), lambda i: (i, 0)),
        compiler_params=pltpu.CompilerParams(
            dimension_semantics=("parallel",),
            vmem_limit_bytes=int(vmem_limit)),
    )(enc, dec, bias, we_w, we_b, wd_w, v_w)

    return out[None, :B, :]                                   # (1, B, E)


def _reference(encoderContexts, decoderHiddenVector, params, paddingMask=None):
    """Pure-JAX transcription of the PyTorch forward for verification."""
    We_w, We_b = params["We_w"], params["We_b"]
    Wd_w, v_w = params["Wd_w"], params["v_w"]
    weightE = encoderContexts[None] @ We_w.T + We_b            # (1, S, B, W)
    weightD = (decoderHiddenVector[:, None] @ Wd_w.T)          # (1, 1, B, W)
    sumW = jnp.tanh(weightE + weightD)
    vw = (sumW @ v_w.T)[..., 0]                                # (1, S, B)
    vw = jnp.transpose(vw, (2, 0, 1))                          # (B, 1, S)
    if paddingMask is not None:
        vw = jnp.where(paddingMask[:, None, :], -jnp.inf, vw)
    vw = jax.nn.softmax(vw, axis=2)
    vectors = jnp.transpose(encoderContexts, (1, 0, 2))        # (B, S, E)
    out = jnp.matmul(vw, vectors)                              # (B, 1, E)
    return jnp.transpose(out, (1, 0, 2))                       # (1, B, E)


if __name__ == "__main__":
    S, B = 8, 2                  # seq len, batch
    E, D, W = 16, 16, 32         # encoderOutputSize, decoderOutputSize, weightsSize

    key = jax.random.PRNGKey(0)
    k_enc, k_dec, k1, k2, k3, k4 = jax.random.split(key, 6)

    encoderContexts = jax.random.normal(k_enc, (S, B, E), dtype=jnp.float32)
    decoderHidden = jax.random.normal(k_dec, (1, B, D), dtype=jnp.float32)

    # Deterministic parameter init mirroring torch.nn.Linear's U(-1/sqrt(fan_in), +)
    def uniform(k, shape, fan_in):
        bound = 1.0 / jnp.sqrt(jnp.float32(fan_in))
        return jax.random.uniform(k, shape, jnp.float32, -bound, bound)

    params = {
        "We_w": uniform(k1, (W, E), E),   # Linear(E -> W) weight
        "We_b": uniform(k2, (W,), E),     # Linear(E -> W) bias
        "Wd_w": uniform(k3, (W, D), D),   # Linear(D -> W, bias=False) weight
        "v_w": uniform(k4, (1, W), W),    # Linear(W -> 1, bias=False) weight
    }

    # Optional padding mask: last 2 positions of batch element 1 are padded.
    paddingMask = jnp.zeros((B, S), dtype=bool).at[1, -2:].set(True)

    out = additive_attention(encoderContexts, decoderHidden, params, paddingMask)
    out = jax.block_until_ready(out)

    ref = _reference(encoderContexts, decoderHidden, params, paddingMask)
    assert out.shape == (1, B, E), out.shape
    assert jnp.allclose(out, ref, atol=1e-5, rtol=1e-4), (
        float(jnp.max(jnp.abs(out - ref))))

    print("KERNEL_OK")
</pallas_src>

<mosaic_0001>
module attributes {stable_mosaic.version = 11 : i64} {
  func.func @_additive_attention_kernel(%arg0: i32, %arg1: memref<8x8x16xf32, #tpu.memory_space<vmem>>, %arg2: memref<8x16xf32, #tpu.memory_space<vmem>>, %arg3: memref<8x8x1xf32, #tpu.memory_space<vmem>>, %arg4: memref<16x32xf32, #tpu.memory_space<vmem>>, %arg5: memref<1x32xf32, #tpu.memory_space<vmem>>, %arg6: memref<16x32xf32, #tpu.memory_space<vmem>>, %arg7: memref<1x32xf32, #tpu.memory_space<vmem>>, %arg8: memref<8x16xf32, #tpu.memory_space<vmem>>) attributes {dimension_semantics = [#tpu.dimension_semantics<parallel>], iteration_bounds = array<i64: 1>, scalar_prefetch = 0 : i64, scratch_operands = 0 : i64, tpu.core_type = #tpu.core_type<tc>, window_params = [{transform_indices = @transform_0, window_bounds = array<i64: 8, 8, 16>}, {transform_indices = @transform_1, window_bounds = array<i64: 8, 16>}, {transform_indices = @transform_2, window_bounds = array<i64: 8, 8, 1>}, {pipeline_mode = #tpu.pipeline_mode<synchronous>, transform_indices = @transform_3, window_bounds = array<i64: 16, 32>}, {pipeline_mode = #tpu.pipeline_mode<synchronous>, transform_indices = @transform_4, window_bounds = array<i64: 1, 32>}, {pipeline_mode = #tpu.pipeline_mode<synchronous>, transform_indices = @transform_5, window_bounds = array<i64: 16, 32>}, {pipeline_mode = #tpu.pipeline_mode<synchronous>, transform_indices = @transform_6, window_bounds = array<i64: 1, 32>}, {transform_indices = @transform_7, window_bounds = array<i64: 8, 16>}]} {
    %c0 = arith.constant 0 : index
    %c0_0 = arith.constant 0 : index
    %c0_1 = arith.constant 0 : index
    %0 = vector.load %arg1[%c0, %c0_0, %c0_1] : memref<8x8x16xf32, #tpu.memory_space<vmem>>, vector<8x8x16xf32>
    %c0_2 = arith.constant 0 : index
    %c0_3 = arith.constant 0 : index
    %1 = vector.load %arg4[%c0_2, %c0_3] : memref<16x32xf32, #tpu.memory_space<vmem>>, vector<16x32xf32>
    %c0_4 = arith.constant 0 : index
    %c0_5 = arith.constant 0 : index
    %2 = vector.load %arg6[%c0_4, %c0_5] : memref<16x32xf32, #tpu.memory_space<vmem>>, vector<16x32xf32>
    %c0_6 = arith.constant 0 : index
    %c0_7 = arith.constant 0 : index
    %3 = vector.load %arg5[%c0_6, %c0_7] : memref<1x32xf32, #tpu.memory_space<vmem>>, vector<1x32xf32>
    %c0_8 = arith.constant 0 : index
    %c0_9 = arith.constant 0 : index
    %4 = vector.load %arg7[%c0_8, %c0_9] : memref<1x32xf32, #tpu.memory_space<vmem>>, vector<1x32xf32>
    %5 = vector.shape_cast %0 : vector<8x8x16xf32> to vector<64x16xf32>
    %cst = arith.constant dense<0.000000e+00> : vector<64x32xf32>
    %6 = tpu.matmul %5, %1, %cst {dimension_numbers = #tpu.dot_dimension_numbers<[1], [0], [0], [1], [0, 0, 1, 1], [], []>} : vector<64x16xf32>, vector<16x32xf32>, vector<64x32xf32> -> vector<64x32xf32>
    %7 = vector.shape_cast %6 : vector<64x32xf32> to vector<8x8x32xf32>
    %c0_10 = arith.constant 0 : index
    %c0_11 = arith.constant 0 : index
    %8 = vector.load %arg2[%c0_10, %c0_11] : memref<8x16xf32, #tpu.memory_space<vmem>>, vector<8x16xf32>
    %cst_12 = arith.constant dense<0.000000e+00> : vector<8x32xf32>
    %9 = tpu.matmul %8, %2, %cst_12 {dimension_numbers = #tpu.dot_dimension_numbers<[1], [0], [0], [1], [0, 0, 1, 1], [], []>} : vector<8x16xf32>, vector<16x32xf32>, vector<8x32xf32> -> vector<8x32xf32>
    %10 = vector.broadcast %3 : vector<1x32xf32> to vector<8x32xf32>
    %11 = arith.addf %9, %10 : vector<8x32xf32>
    %12 = vector.shape_cast %11 : vector<8x32xf32> to vector<1x8x32xf32>
    %13 = vector.broadcast %12 : vector<1x8x32xf32> to vector<8x8x32xf32>
    %14 = arith.addf %7, %13 : vector<8x8x32xf32>
    %15 = math.tanh %14 : vector<8x8x32xf32>
    %16 = vector.shape_cast %4 : vector<1x32xf32> to vector<1x1x32xf32>
    %17 = vector.broadcast %16 : vector<1x1x32xf32> to vector<8x8x32xf32>
    %18 = arith.mulf %15, %17 : vector<8x8x32xf32>
    %cst_13 = arith.constant dense<0.000000e+00> : vector<8x8xf32>
    %19 = vector.multi_reduction <add>, %18, %cst_13 [2] : vector<8x8x32xf32> to vector<8x8xf32>
    %20 = vector.shape_cast %19 : vector<8x8xf32> to vector<8x8x1xf32>
    %c0_14 = arith.constant 0 : index
    %c0_15 = arith.constant 0 : index
    %c0_16 = arith.constant 0 : index
    %21 = vector.load %arg3[%c0_14, %c0_15, %c0_16] : memref<8x8x1xf32, #tpu.memory_space<vmem>>, vector<8x8x1xf32>
    %22 = arith.addf %20, %21 : vector<8x8x1xf32>
    %cst_17 = arith.constant dense<0xFF800000> : vector<8x1xf32>
    %23 = vector.multi_reduction <maximumf>, %22, %cst_17 [0] : vector<8x8x1xf32> to vector<8x1xf32>
    %24 = vector.shape_cast %23 : vector<8x1xf32> to vector<1x8x1xf32>
    %25 = vector.broadcast %24 : vector<1x8x1xf32> to vector<8x8x1xf32>
    %26 = arith.subf %22, %25 : vector<8x8x1xf32>
    %27 = math.exp %26 : vector<8x8x1xf32>
    %cst_18 = arith.constant dense<0.000000e+00> : vector<8x1xf32>
    %28 = vector.multi_reduction <add>, %27, %cst_18 [0] : vector<8x8x1xf32> to vector<8x1xf32>
    %29 = vector.shape_cast %28 : vector<8x1xf32> to vector<1x8x1xf32>
    %30 = vector.broadcast %29 : vector<1x8x1xf32> to vector<8x8x1xf32>
    %31 = arith.divf %27, %30 : vector<8x8x1xf32>
    %32 = vector.broadcast %31 : vector<8x8x1xf32> to vector<8x8x16xf32>
    %33 = arith.mulf %32, %0 : vector<8x8x16xf32>
    %cst_19 = arith.constant dense<0.000000e+00> : vector<8x16xf32>
    %34 = vector.multi_reduction <add>, %33, %cst_19 [0] : vector<8x8x16xf32> to vector<8x16xf32>
    %c0_20 = arith.constant 0 : index
    %c0_21 = arith.constant 0 : index
    %35 = vector.load %arg8[%c0_20, %c0_21] : memref<8x16xf32, #tpu.memory_space<vmem>>, vector<8x16xf32>
    tpu.vector_store %arg8[%c0_20, %c0_21], %34 {strides = array<i32>} : memref<8x16xf32, #tpu.memory_space<vmem>>, vector<8x16xf32>,
    return
  }
  func.func @transform_0(%arg0: i32) -> (i32, i32, i32) {
    %c0_i32 = arith.constant 0 : i32
    %c0_i32_0 = arith.constant 0 : i32
    %c0_i32_1 = arith.constant 0 : i32
    return %c0_i32, %arg0, %c0_i32_0 : i32, i32, i32
  }
  func.func @transform_1(%arg0: i32) -> (i32, i32) {
    %c0_i32 = arith.constant 0 : i32
    %c0_i32_0 = arith.constant 0 : i32
    return %arg0, %c0_i32 : i32, i32
  }
  func.func @transform_2(%arg0: i32) -> (i32, i32, i32) {
    %c0_i32 = arith.constant 0 : i32
    %c0_i32_0 = arith.constant 0 : i32
    %c0_i32_1 = arith.constant 0 : i32
    return %c0_i32, %arg0, %c0_i32_0 : i32, i32, i32
  }
  func.func @transform_3(%arg0: i32) -> (i32, i32) {
    %c0_i32 = arith.constant 0 : i32
    %c0_i32_0 = arith.constant 0 : i32
    %c0_i32_1 = arith.constant 0 : i32
    return %c0_i32, %c0_i32_0 : i32, i32
  }
  func.func @transform_4(%arg0: i32) -> (i32, i32) {
    %c0_i32 = arith.constant 0 : i32
    %c0_i32_0 = arith.constant 0 : i32
    %c0_i32_1 = arith.constant 0 : i32
    return %c0_i32, %c0_i32_0 : i32, i32
  }
  func.func @transform_5(%arg0: i32) -> (i32, i32) {
    %c0_i32 = arith.constant 0 : i32
    %c0_i32_0 = arith.constant 0 : i32
    %c0_i32_1 = arith.constant 0 : i32
    return %c0_i32, %c0_i32_0 : i32, i32
  }
  func.func @transform_6(%arg0: i32) -> (i32, i32) {
    %c0_i32 = arith.constant 0 : i32
    %c0_i32_0 = arith.constant 0 : i32
    %c0_i32_1 = arith.constant 0 : i32
    return %c0_i32, %c0_i32_0 : i32, i32
  }
  func.func @transform_7(%arg0: i32) -> (i32, i32) {
    %c0_i32 = arith.constant 0 : i32
    %c0_i32_0 = arith.constant 0 : i32
    return %arg0, %c0_i32 : i32, i32
  }
}

</mosaic_0001>

<llo_original>
// kernel: tpu_custom_call.1
$region0: #{tpu_custom_call.1}
  #allocation0 [shape = 'u32[]', space=smem, size = 0x4, offset = 0x4, fixed_abs, tag = 'smem constant byte address 0x4 - core index']
  #allocation1 [shape = 'u32[144,128]{1,0:T(1,128)}', space=vmem, size = 0x12000, scoped, tag = 'internal scratch']
  %s0 = inlined_call_operand.vmem [shape: f32[8,8,16], index: 0, kind: input, shape index: {}]
  %s1 = inlined_call_operand.hbm [shape: f32[8,16], index: 1, kind: input, shape index: {}]
  %s2 = inlined_call_operand.vmem [shape: f32[8,8,1], index: 2, kind: input, shape index: {}]
  %s3 = inlined_call_operand.vmem [shape: f32[16,32], index: 3, kind: input, shape index: {}]
  %s4 = inlined_call_operand.vmem [shape: f32[1,32], index: 4, kind: input, shape index: {}]
  %s5 = inlined_call_operand.hbm [shape: f32[16,32], index: 5, kind: input, shape index: {}]
  %s6 = inlined_call_operand.vmem [shape: f32[1,32], index: 6, kind: input, shape index: {}]
  %s7 = inlined_call_operand.hbm [shape: f32[8,16], index: 7, kind: output, shape index: {}]
  %s8 = sld [smem:[#allocation0]]
  $region46: #{tpu_custom_call.1} parent=0
    _
  %s10 = ssub.s32 1, %s8
  %s11 = scalar_select 0, %s10, %s8
  $region1: #{tpu_custom_call.1} parent=0
    #allocation2 [shape = 'u8[4096]{0}', space=vmem, size = 0x1000, scoped, tag = 'input window, operand 1, single buffered']
    #allocation3 [shape = 's32[1]{0}', space=sflag, size = 0x4, scoped, tag = 'scoped memory for tpu_custom_call.1']
    #allocation4 [shape = 's32[1]{0}', space=sflag, size = 0x4, scoped, tag = 'scoped memory for tpu_custom_call.1']
    #allocation5 [shape = 'u8[8192]{0}', space=vmem, size = 0x2000, scoped, tag = 'input window, operand 5, single buffered']
    #allocation6 [shape = 's32[1]{0}', space=sflag, size = 0x4, scoped, tag = 'scoped memory for tpu_custom_call.1']
    #allocation7 [shape = 'u8[4096]{0}', space=vmem, size = 0x1000, scoped, tag = 'output window, operand 0, single buffered']
    %12 = vsyncpa [#allocation3], 0
    %13 = vsyncpa [#allocation6], 0
    %14 = vsyncpa [#allocation4], 0
    // Predicated region
    $region2: #{tpu_custom_call.1} parent=1 // pred_check
      _
    $region3: #{tpu_custom_call.1} parent=1 // pred_check_branch
      %16 = sbr.rel (0) target = $region5
    $region4: #{tpu_custom_call.1} parent=1 // pred_region
      _
    $region5: #{tpu_custom_call.1} parent=1 // pred_fallthru
      _
    // Predicated region
    $region6: #{tpu_custom_call.1} parent=1 // pred_check
      _
    $region7: #{tpu_custom_call.1} parent=1 // pred_check_branch
      %18 = sbr.rel (0) target = $region9
    $region8: #{tpu_custom_call.1} parent=1 // pred_region
      %s20 = ssub.s32 128, 128
      %21 = vsyncadd [#allocation3], %s20
      %s23 = sshll.u32 [#allocation2], 4
      %s24 = int_to_ptr.vmem [resolvable:$true] %s23
      %26 = dma.hbm_to_vmem [thread:$0]  %s1, 128, %s24, [#allocation3]
    $region9: #{tpu_custom_call.1} parent=1 // pred_fallthru
      _
    // Predicated region
    $region10: #{tpu_custom_call.1} parent=1 // pred_check
      _
    $region11: #{tpu_custom_call.1} parent=1 // pred_check_branch
      %28 = sbr.rel (0) target = $region13
    $region12: #{tpu_custom_call.1} parent=1 // pred_region
      _
    $region13: #{tpu_custom_call.1} parent=1 // pred_fallthru
      _
    // Predicated region
    $region14: #{tpu_custom_call.1} parent=1 // pred_check
      _
    $region15: #{tpu_custom_call.1} parent=1 // pred_check_branch
      %30 = sbr.rel (0) target = $region17
    $region16: #{tpu_custom_call.1} parent=1 // pred_region
      _
    $region17: #{tpu_custom_call.1} parent=1 // pred_fallthru
      _
    // Predicated region
    $region18: #{tpu_custom_call.1} parent=1 // pred_check
      _
    $region19: #{tpu_custom_call.1} parent=1 // pred_check_branch
      %32 = sbr.rel (0) target = $region21
    $region20: #{tpu_custom_call.1} parent=1 // pred_region
      _
    $region21: #{tpu_custom_call.1} parent=1 // pred_fallthru
      _
    // Predicated region
    $region22: #{tpu_custom_call.1} parent=1 // pred_check
      _
    $region23: #{tpu_custom_call.1} parent=1 // pred_check_branch
      %34 = sbr.rel (0) target = $region25
    $region24: #{tpu_custom_call.1} parent=1 // pred_region
      %s36 = ssub.s32 256, 256
      %37 = vsyncadd [#allocation6], %s36
      %s38 = sshll.u32 [#allocation5], 4
      %s39 = int_to_ptr.vmem [resolvable:$true] %s38
      %44 = dma.hbm_to_vmem [thread:$0]  %s5, 256, %s39, [#allocation6], 128, 128, 8
    $region25: #{tpu_custom_call.1} parent=1 // pred_fallthru
      _
    // Predicated region
    $region26: #{tpu_custom_call.1} parent=1 // pred_check
      _
    $region27: #{tpu_custom_call.1} parent=1 // pred_check_branch
      %46 = sbr.rel (0) target = $region29
    $region28: #{tpu_custom_call.1} parent=1 // pred_region
      _
    $region29: #{tpu_custom_call.1} parent=1 // pred_fallthru
      _
    // Predicated region
    $region30: #{tpu_custom_call.1} parent=1 // pred_check
      _
    $region31: #{tpu_custom_call.1} parent=1 // pred_check_branch
      %48 = sbr.rel (0) target = $region33
    $region32: #{tpu_custom_call.1} parent=1 // pred_region
      %49 = dma.done [#allocation3], 128
    $region33: #{tpu_custom_call.1} parent=1 // pred_fallthru
      _
    // Predicated region
    $region34: #{tpu_custom_call.1} parent=1 // pred_check
      _
    $region35: #{tpu_custom_call.1} parent=1 // pred_check_branch
      %51 = sbr.rel (0) target = $region37
    $region36: #{tpu_custom_call.1} parent=1 // pred_region
      %52 = dma.done [#allocation6], 256
    $region37: #{tpu_custom_call.1} parent=1 // pred_fallthru
      _
    %v53 = vld [vmem:[%s0] sm:$0xff]
    %v54 = vld [vmem:[%s0 + $0x8] sm:$0xff]
    %v55 = vld [vmem:[%s0 + $0x10] sm:$0xff]
    %v56 = vld [vmem:[%s0 + $0x18] sm:$0xff]
    %v57 = vld [vmem:[%s0 + $0x20] sm:$0xff]
    %v58 = vld [vmem:[%s0 + $0x28] sm:$0xff]
    %v59 = vld [vmem:[%s0 + $0x30] sm:$0xff]
    %v60 = vld [vmem:[%s0 + $0x38] sm:$0xff]
    %v61 = vld [vmem:[%s3] sm:$0xff]
    %v62 = vld [vmem:[%s3 + $0x8] sm:$0xff]
    %v63 = vld [vmem:[#allocation5] sm:$0xff]
    %v64 = vld [vmem:[#allocation5 + $0x8] sm:$0xff]
    %v65 = vld [vmem:[%s4] sm:$0x1]
    %v66 = vld [vmem:[%s6] sm:$0x1]
    %vm67 = vcmask 130048
    %v69 = vsel %vm67, %v53, 0
    %v72 = vsel %vm67, %v54, 0
    %v75 = vsel %vm67, %v55, 0
    %v78 = vsel %vm67, %v56, 0
    %v81 = vsel %vm67, %v57, 0
    %v84 = vsel %vm67, %v58, 0
    %v87 = vsel %vm67, %v59, 0
    %v90 = vsel %vm67, %v60, 0
    %92 = vmatprep.subr.mxu0 0.0
    %93 = vmatpush1.msra.mxu0 %v61
    %94 = vmatprep.subr.mxu0 0.0
    %95 = vmatpush1.msra.mxu0 %v62
    %96 = vmatprep.subr.mxu0 0.0
    %97 = vmatpush1.msra.mxu0 0.0
    %98 = vmatprep.subr.mxu0 0.0
    %99 = vmatpush1.msra.mxu0 0.0
    %100 = vmatprep.subr.mxu0 0.0
    %101 = vmatpush1.msra.mxu0 0.0
    %102 = vmatprep.subr.mxu0 0.0
    %103 = vmatpush1.msra.mxu0 0.0
    %104 = vmatprep.subr.mxu0 0.0
    %105 = vmatpush1.msra.mxu0 0.0
    %106 = vmatprep.subr.mxu0 0.0
    %107 = vmatpush1.msra.mxu0 0.0
    %108 = vmatprep.subr.mxu0 0.0
    %109 = vmatpush1.msra.mxu0 0.0
    %110 = vmatprep.subr.mxu0 0.0
    %111 = vmatpush1.msra.mxu0 0.0
    %112 = vmatprep.subr.mxu0 0.0
    %113 = vmatpush1.msra.mxu0 0.0
    %114 = vmatprep.subr.mxu0 0.0
    %115 = vmatpush1.msra.mxu0 0.0
    %116 = vmatprep.subr.mxu0 0.0
    %117 = vmatpush1.msra.mxu0 0.0
    %118 = vmatprep.subr.mxu0 0.0
    %119 = vmatpush1.msra.mxu0 0.0
    %120 = vmatprep.subr.mxu0 0.0
    %121 = vmatpush1.msra.mxu0 0.0
    %122 = vmatprep.subr.mxu0 0.0
    %123 = vmatpush1.msra.mxu0 0.0
    %124 = vmatprep.subr.mxu0 0.0
    %125 = vmatpush1.msra.mxu0 0.0
    %126 = vmatprep.subr.mxu0 0.0
    %127 = vmatpush1.msra.mxu0 0.0
    %128 = vmatprep.subr.mxu0 0.0
    %129 = vmatpush1.msra.mxu0 0.0
    %130 = vmatprep.subr.mxu0 0.0
    %131 = vmatpush1.msra.mxu0 0.0
    %132 = vmatprep.subr.mxu0 0.0
    %133 = vmatpush1.msra.mxu0 0.0
    %134 = vmatprep.subr.mxu0 0.0
    %135 = vmatpush1.msra.mxu0 0.0
    %136 = vmatprep.subr.mxu0 0.0
    %137 = vmatpush1.msra.mxu0 0.0
    %138 = vmatprep.subr.mxu0 0.0
    %139 = vmatpush1.msra.mxu0 0.0
    %140 = vmatprep.subr.mxu0 0.0
    %141 = vmatpush1.msra.mxu0 0.0
    %142 = vmatprep.subr.mxu0 0.0
    %143 = vmatpush1.msra.mxu0 0.0
    %144 = vmatprep.subr.mxu0 0.0
    %145 = vmatpush1.msra.mxu0 0.0
    %146 = vmatprep.subr.mxu0 0.0
    %147 = vmatpush1.msra.mxu0 0.0
    %148 = vmatprep.subr.mxu0 0.0
    %149 = vmatpush1.msra.mxu0 0.0
    %150 = vmatprep.subr.mxu0 0.0
    %151 = vmatpush1.msra.mxu0 0.0
    %152 = vmatprep.subr.mxu0 0.0
    %153 = vmatpush1.msra.mxu0 0.0
    %154 = vmatprep.subr.mxu0 0.0
    %155 = vmatpush1.msra.mxu0 0.0
    %156 = vmatprep.mubr.f32.mxu0 0.0
    %157 = vmatmul.mubr.f32.gmra.mrb[0].mxu0 %v69
    %v158 = vpop.f32.mrb[0].mxu0
    %v159 = vadd.f32 0.0, %v158
    %v160 = vpop.f32.mrb[0].mxu0
    %161 = vmatprep.mubr.f32.mxu0 0.0
    %162 = vmatmul.mubr.f32.gmra.mrb[0].mxu0 %v72
    %v163 = vpop.f32.mrb[0].mxu0
    %v164 = vadd.f32 0.0, %v163
    %v165 = vpop.f32.mrb[0].mxu0
    %166 = vmatprep.mubr.f32.mxu0 0.0
    %167 = vmatmul.mubr.f32.gmra.mrb[0].mxu0 %v75
    %v168 = vpop.f32.mrb[0].mxu0
    %v169 = vadd.f32 0.0, %v168
    %v170 = vpop.f32.mrb[0].mxu0
    %171 = vmatprep.mubr.f32.mxu0 0.0
    %172 = vmatmul.mubr.f32.gmra.mrb[0].mxu0 %v78
    %v173 = vpop.f32.mrb[0].mxu0
    %v174 = vadd.f32 0.0, %v173
    %v175 = vpop.f32.mrb[0].mxu0
    %176 = vmatprep.mubr.f32.mxu0 0.0
    %177 = vmatmul.mubr.f32.gmra.mrb[0].mxu0 %v81
    %v178 = vpop.f32.mrb[0].mxu0
    %v179 = vadd.f32 0.0, %v178
    %v180 = vpop.f32.mrb[0].mxu0
    %181 = vmatprep.mubr.f32.mxu0 0.0
    %182 = vmatmul.mubr.f32.gmra.mrb[0].mxu0 %v84
    %v183 = vpop.f32.mrb[0].mxu0
    %v184 = vadd.f32 0.0, %v183
    %v185 = vpop.f32.mrb[0].mxu0
    %186 = vmatprep.mubr.f32.mxu0 0.0
    %187 = vmatmul.mubr.f32.gmra.mrb[0].mxu0 %v87
    %v188 = vpop.f32.mrb[0].mxu0
    %v189 = vadd.f32 0.0, %v188
    %v190 = vpop.f32.mrb[0].mxu0
    %191 = vmatprep.mubr.f32.mxu0 0.0
    %192 = vmatmul.mubr.f32.gmra.mrb[0].mxu0 %v90
    %v193 = vpop.f32.mrb[0].mxu0
    %v194 = vadd.f32 0.0, %v193
    %v195 = vpop.f32.mrb[0].mxu0
    %196 = vdwg.mxu0
    %v197 = vld [vmem:[#allocation2] sm:$0xff]
    %v199 = vlaneseq
    %v200 = vshrl.u32 %v199, 7
    %v201 = vsub.s32 0, %v200
    %v202 = vrot.slane %v65, %v201
    %v205 = vsel %vm67, %v197, 0
    %207 = vmatprep.subr.mxu0 0.0
    %208 = vmatpush1.msra.mxu0 %v63
    %209 = vmatprep.subr.mxu0 0.0
    %210 = vmatpush1.msra.mxu0 %v64
    %211 = vmatprep.subr.mxu0 0.0
    %212 = vmatpush1.msra.mxu0 0.0
    %213 = vmatprep.subr.mxu0 0.0
    %214 = vmatpush1.msra.mxu0 0.0
    %215 = vmatprep.subr.mxu0 0.0
    %216 = vmatpush1.msra.mxu0 0.0
    %217 = vmatprep.subr.mxu0 0.0
    %218 = vmatpush1.msra.mxu0 0.0
    %219 = vmatprep.subr.mxu0 0.0
    %220 = vmatpush1.msra.mxu0 0.0
    %221 = vmatprep.subr.mxu0 0.0
    %222 = vmatpush1.msra.mxu0 0.0
    %223 = vmatprep.subr.mxu0 0.0
    %224 = vmatpush1.msra.mxu0 0.0
    %225 = vmatprep.subr.mxu0 0.0
    %226 = vmatpush1.msra.mxu0 0.0
    %227 = vmatprep.subr.mxu0 0.0
    %228 = vmatpush1.msra.mxu0 0.0
    %229 = vmatprep.subr.mxu0 0.0
    %230 = vmatpush1.msra.mxu0 0.0
    %231 = vmatprep.subr.mxu0 0.0
    %232 = vmatpush1.msra.mxu0 0.0
    %233 = vmatprep.subr.mxu0 0.0
    %234 = vmatpush1.msra.mxu0 0.0
    %235 = vmatprep.subr.mxu0 0.0
    %236 = vmatpush1.msra.mxu0 0.0
    %237 = vmatprep.subr.mxu0 0.0
    %238 = vmatpush1.msra.mxu0 0.0
    %239 = vmatprep.subr.mxu0 0.0
    %240 = vmatpush1.msra.mxu0 0.0
    %241 = vmatprep.subr.mxu0 0.0
    %242 = vmatpush1.msra.mxu0 0.0
    %243 = vmatprep.subr.mxu0 0.0
    %244 = vmatpush1.msra.mxu0 0.0
    %245 = vmatprep.subr.mxu0 0.0
    %246 = vmatpush1.msra.mxu0 0.0
    %247 = vmatprep.subr.mxu0 0.0
    %248 = vmatpush1.msra.mxu0 0.0
    %249 = vmatprep.subr.mxu0 0.0
    %250 = vmatpush1.msra.mxu0 0.0
    %251 = vmatprep.subr.mxu0 0.0
    %252 = vmatpush1.msra.mxu0 0.0
    %253 = vmatprep.subr.mxu0 0.0
    %254 = vmatpush1.msra.mxu0 0.0
    %255 = vmatprep.subr.mxu0 0.0
    %256 = vmatpush1.msra.mxu0 0.0
    %257 = vmatprep.subr.mxu0 0.0
    %258 = vmatpush1.msra.mxu0 0.0
    %259 = vmatprep.subr.mxu0 0.0
    %260 = vmatpush1.msra.mxu0 0.0
    %261 = vmatprep.subr.mxu0 0.0
    %262 = vmatpush1.msra.mxu0 0.0
    %263 = vmatprep.subr.mxu0 0.0
    %264 = vmatpush1.msra.mxu0 0.0
    %265 = vmatprep.subr.mxu0 0.0
    %266 = vmatpush1.msra.mxu0 0.0
    %267 = vmatprep.subr.mxu0 0.0
    %268 = vmatpush1.msra.mxu0 0.0
    %269 = vmatprep.subr.mxu0 0.0
    %270 = vmatpush1.msra.mxu0 0.0
    %271 = vmatprep.mubr.f32.mxu0 0.0
    %272 = vmatmul.mubr.f32.gmra.mrb[0].mxu0 %v205
    %v273 = vpop.f32.mrb[0].mxu0
    %v274 = vadd.f32 %v202, %v273
    %v275 = vpop.f32.mrb[0].mxu0
    %276 = vdwg.mxu0
    %v277 = vadd.f32 %v159, %v274
    %v278 = vadd.f32 %v164, %v274
    %v279 = vadd.f32 %v169, %v274
    %v280 = vadd.f32 %v174, %v274
    %v281 = vadd.f32 %v179, %v274
    %v282 = vadd.f32 %v184, %v274
    %v283 = vadd.f32 %v189, %v274
    %v284 = vadd.f32 %v194, %v274
    %v285 = vtanh.pop %v277
    %v286 = vtanh.pop %v278
    %v287 = vtanh.pop %v279
    %v288 = vtanh.pop %v280
    %v289 = vtanh.pop %v281
    %v290 = vtanh.pop %v282
    %v291 = vtanh.pop %v283
    %v292 = vtanh.pop %v284
    %v294 = vlaneseq
    %v295 = vshrl.u32 %v294, 7
    %v296 = vsub.s32 0, %v295
    %v297 = vrot.slane %v66, %v296
    %v299 = vmul.f32 %v285, %v297
    %v300 = vmul.f32 %v286, %v297
    %v301 = vmul.f32 %v287, %v297
    %v302 = vmul.f32 %v288, %v297
    %v303 = vmul.f32 %v289, %v297
    %v304 = vmul.f32 %v290, %v297
    %v305 = vmul.f32 %v291, %v297
    %v306 = vmul.f32 %v292, %v297
    %vm307 = vcmask 261120
    %v308 = vsel %vm307, %v299, 0.0
    %309 = vadd.xlane.f32.xlu0 %v308
    %v310 = vpop.xlane.xlu0 %309
    %v311 = vsel %vm307, %v300, 0.0
    %312 = vadd.xlane.f32.xlu0 %v311
    %v313 = vpop.xlane.xlu0 %312
    %v314 = vsel %vm307, %v301, 0.0
    %315 = vadd.xlane.f32.xlu0 %v314
    %v316 = vpop.xlane.xlu0 %315
    %v317 = vsel %vm307, %v302, 0.0
    %318 = vadd.xlane.f32.xlu0 %v317
    %v319 = vpop.xlane.xlu0 %318
    %v320 = vsel %vm307, %v303, 0.0
    %321 = vadd.xlane.f32.xlu0 %v320
    %v322 = vpop.xlane.xlu0 %321
    %v323 = vsel %vm307, %v304, 0.0
    %324 = vadd.xlane.f32.xlu0 %v323
    %v325 = vpop.xlane.xlu0 %324
    %v326 = vsel %vm307, %v305, 0.0
    %327 = vadd.xlane.f32.xlu0 %v326
    %v328 = vpop.xlane.xlu0 %327
    %v329 = vsel %vm307, %v306, 0.0
    %330 = vadd.xlane.f32.xlu0 %v329
    %v331 = vpop.xlane.xlu0 %330
    %v332 = vld [vmem:[%s2] sm:$0xff]
    %v333 = vld [vmem:[%s2 + $0x8] sm:$0xff]
    %v334 = vld [vmem:[%s2 + $0x10] sm:$0xff]
    %v335 = vld [vmem:[%s2 + $0x18] sm:$0xff]
    %v336 = vld [vmem:[%s2 + $0x20] sm:$0xff]
    %v337 = vld [vmem:[%s2 + $0x28] sm:$0xff]
    %v338 = vld [vmem:[%s2 + $0x30] sm:$0xff]
    %v339 = vld [vmem:[%s2 + $0x38] sm:$0xff]
    %v340 = vadd.f32 %v310, %v332
    %v341 = vadd.f32 %v313, %v333
    %v342 = vadd.f32 %v316, %v334
    %v343 = vadd.f32 %v319, %v335
    %v344 = vadd.f32 %v322, %v336
    %v345 = vadd.f32 %v325, %v337
    %v346 = vadd.f32 %v328, %v338
    %v347 = vadd.f32 %v331, %v339
    %vm348 = vcmask 7168
    %v349 = vsel %vm348, %v340, -inf
    %v350 = vsel %vm348, %v341, -inf
    %v351 = vsel %vm348, %v342, -inf
    %v352 = vsel %vm348, %v343, -inf
    %v353 = vsel %vm348, %v344, -inf
    %v354 = vmax.f32 %v349, %v353
    %v355 = vsel %vm348, %v345, -inf
    %v356 = vmax.f32 %v350, %v355
    %v357 = vsel %vm348, %v346, -inf
    %v358 = vmax.f32 %v351, %v357
    %v359 = vsel %vm348, %v347, -inf
    %v360 = vmax.f32 %v352, %v359
    %v361 = vmax.f32 %v354, %v356
    %v362 = vmax.f32 %v358, %v360
    %v363 = vmax.f32 %v361, %v362
    %v364 = vsub.f32 %v340, %v363
    %v365 = vsub.f32 %v341, %v363
    %v366 = vsub.f32 %v342, %v363
    %v367 = vsub.f32 %v343, %v363
    %v368 = vsub.f32 %v344, %v363
    %v369 = vsub.f32 %v345, %v363
    %v370 = vsub.f32 %v346, %v363
    %v371 = vsub.f32 %v347, %v363
    %v372 = vmul.f32 %v364, 1.442695
    %v373 = vpow.pop %v372
    %v374 = vmul.f32 %v365, 1.442695
    %v375 = vpow.pop %v374
    %v376 = vmul.f32 %v366, 1.442695
    %v377 = vpow.pop %v376
    %v378 = vmul.f32 %v367, 1.442695
    %v379 = vpow.pop %v378
    %v380 = vmul.f32 %v368, 1.442695
    %v381 = vpow.pop %v380
    %v382 = vmul.f32 %v369, 1.442695
    %v383 = vpow.pop %v382
    %v384 = vmul.f32 %v370, 1.442695
    %v385 = vpow.pop %v384
    %v386 = vmul.f32 %v371, 1.442695
    %v387 = vpow.pop %v386
    %v388 = vsel %vm348, %v373, 0.0
    %v389 = vsel %vm348, %v375, 0.0
    %v390 = vadd.f32 %v388, %v389
    %v391 = vsel %vm348, %v377, 0.0
    %v392 = vadd.f32 %v390, %v391
    %v393 = vsel %vm348, %v379, 0.0
    %v394 = vadd.f32 %v392, %v393
    %v395 = vsel %vm348, %v381, 0.0
    %v396 = vadd.f32 %v394, %v395
    %v397 = vsel %vm348, %v383, 0.0
    %v398 = vadd.f32 %v396, %v397
    %v399 = vsel %vm348, %v385, 0.0
    %v400 = vadd.f32 %v398, %v399
    %v401 = vsel %vm348, %v387, 0.0
    %v402 = vadd.f32 %v400, %v401
    %v403 = vrcp.pop %v402
    %v404 = vmul.f32 %v373, %v403
    %v405 = vmul.f32 %v375, %v403
    %v406 = vmul.f32 %v377, %v403
    %v407 = vmul.f32 %v379, %v403
    %v408 = vmul.f32 %v381, %v403
    %v409 = vmul.f32 %v383, %v403
    %v410 = vmul.f32 %v385, %v403
    %v411 = vmul.f32 %v387, %v403
    %413 = vset.pattern.permute.xlu0 0
    %414 = vperm.xlu0 %413, %v404
    %v415 = vpop.permute.xlu0 %414
    %418 = vset.pattern.permute.xlu0 0
    %419 = vperm.xlu0 %418, %v405
    %v420 = vpop.permute.xlu0 %419
    %423 = vset.pattern.permute.xlu0 0
    %424 = vperm.xlu0 %423, %v406
    %v425 = vpop.permute.xlu0 %424
    %428 = vset.pattern.permute.xlu0 0
    %429 = vperm.xlu0 %428, %v407
    %v430 = vpop.permute.xlu0 %429
    %433 = vset.pattern.permute.xlu0 0
    %434 = vperm.xlu0 %433, %v408
    %v435 = vpop.permute.xlu0 %434
    %438 = vset.pattern.permute.xlu0 0
    %439 = vperm.xlu0 %438, %v409
    %v440 = vpop.permute.xlu0 %439
    %443 = vset.pattern.permute.xlu0 0
    %444 = vperm.xlu0 %443, %v410
    %v445 = vpop.permute.xlu0 %444
    %448 = vset.pattern.permute.xlu0 0
    %449 = vperm.xlu0 %448, %v411
    %v450 = vpop.permute.xlu0 %449
    %v452 = vmul.f32 %v415, %v53
    %v453 = vmul.f32 %v420, %v54
    %v454 = vmul.f32 %v425, %v55
    %v455 = vmul.f32 %v430, %v56
    %v456 = vmul.f32 %v435, %v57
    %v457 = vmul.f32 %v440, %v58
    %v458 = vmul.f32 %v445, %v59
    %v459 = vmul.f32 %v450, %v60
    %v460 = vsel %vm67, %v452, 0.0
    %v461 = vsel %vm67, %v453, 0.0
    %v462 = vadd.f32 %v460, %v461
    %v463 = vsel %vm67, %v454, 0.0
    %v464 = vadd.f32 %v462, %v463
    %v465 = vsel %vm67, %v455, 0.0
    %v466 = vadd.f32 %v464, %v465
    %v467 = vsel %vm67, %v456, 0.0
    %v468 = vadd.f32 %v466, %v467
    %v469 = vsel %vm67, %v457, 0.0
    %v470 = vadd.f32 %v468, %v469
    %v471 = vsel %vm67, %v458, 0.0
    %v472 = vadd.f32 %v470, %v471
    %v473 = vsel %vm67, %v459, 0.0
    %v474 = vadd.f32 %v472, %v473
    %475 = vst.msk [vmem:[#allocation7] sm:$0xff] %vm67, %v474
    // Predicated region
    $region38: #{tpu_custom_call.1} parent=1 // pred_check
      _
    $region39: #{tpu_custom_call.1} parent=1 // pred_check_branch
      %477 = sbr.rel (0) target = $region41
    $region40: #{tpu_custom_call.1} parent=1 // pred_region
      %s479 = ssub.s32 128, 128
      %480 = vsyncadd [#allocation4], %s479
      %s482 = sshll.u32 [#allocation7], 4
      %s483 = int_to_ptr.vmem [resolvable:$true] %s482
      %485 = dma.vmem_to_hbm [thread:$0]  %s483, 128, %s7, [#allocation4]
    $region41: #{tpu_custom_call.1} parent=1 // pred_fallthru
      _
    // Predicated region
    $region42: #{tpu_custom_call.1} parent=1 // pred_check
      _
    $region43: #{tpu_custom_call.1} parent=1 // pred_check_branch
      %487 = sbr.rel (0) target = $region45
    $region44: #{tpu_custom_call.1} parent=1 // pred_region
      %488 = dma.done [#allocation4], 128
    $region45: #{tpu_custom_call.1} parent=1 // pred_fallthru
      _
    %489 = vsyncpa [#allocation3], 1
    %490 = vsyncpa [#allocation6], 1
    %491 = vsyncpa [#allocation4], 1

</llo_original>
